<compile_context>
chip_gen: v5e
topology: v5e:2x2
jax: 0.10.0
libtpu: 0.0.40
codegen_flags: <defaults>
</compile_context>

<pallas_src>
import functools
import math

import jax
import jax.numpy as jnp
from jax import lax
from jax.experimental import pallas as pl
from jax.experimental.pallas import tpu as pltpu


# ----------------------------------------------------------------------------
# Plain-JAX pieces (FFT cannot be expressed in Pallas)
# ----------------------------------------------------------------------------

def inv_mag(x):
    """ifft2(exp(i * angle(fft2(x)))).real — phase-only reconstruction."""
    f = jnp.fft.fft2(x)                                   # over last two axes
    phase_only = jnp.exp(1j * jnp.angle(f))
    return jnp.real(jnp.fft.ifft2(phase_only)).astype(x.dtype)


def toning_kernel_size(channels, b=1, gamma=2):
    k = int(abs(math.log2(channels) / gamma + b / gamma))
    return k if k % 2 else k + 1


def _conv1d_band_matrix(w, channels):
    """Fold the 1-D conv (single in/out channel, zero padding) into a (C, C)
    band matrix W such that  conv1d(y)[o] = sum_i W[o, i] * y[i]."""
    k = w.shape[0]
    pad = (k - 1) // 2
    o = jnp.arange(channels)[:, None]
    i = jnp.arange(channels)[None, :]
    t = i - o + pad                                        # tap index
    valid = (t >= 0) & (t < k)
    return jnp.where(valid, w[jnp.clip(t, 0, k - 1)], 0.0).astype(jnp.float32)


# ----------------------------------------------------------------------------
# Fused Pallas kernel: pool(x1) -> channel conv -> sigmoid -> gate x
# ----------------------------------------------------------------------------

def _toning_kernel(x_ref, x1_ref, wband_ref, o_ref, *, inv_hw):
    x1 = x1_ref[0]                                         # (C, HW), lane-dense
    # Channel-wise 1-D conv as a band matmul. Applying it before the spatial
    # mean is algebraically identical (both are linear) and keeps all matmul
    # operands lane-dense (no degenerate N=1 matmul shapes).
    conv = jnp.dot(wband_ref[...], x1,
                   preferred_element_type=jnp.float32)     # (C, HW)
    pooled = jnp.sum(conv, axis=-1, keepdims=True) * inv_hw  # (C, 1)
    gate = 1.0 / (1.0 + jnp.exp(-pooled))                  # sigmoid (EUP)
    o_ref[0] = (x_ref[0].astype(jnp.float32) * gate).astype(o_ref.dtype)


def toning_forward(x_nchw, conv_w):
    """x_nchw: (B, C, H, W) float32; conv_w: (k,) Conv1d weight (bias=False)."""
    B, C, H, W = x_nchw.shape
    HW = H * W

    x1 = inv_mag(x_nchw)                                   # plain JAX (FFT)
    wband = _conv1d_band_matrix(conv_w, C)                 # (C, C), built once

    # Lane-dense view: channels on sublanes, H*W on lanes.
    x_flat = x_nchw.reshape(B, C, HW)
    x1_flat = x1.reshape(B, C, HW)

    kern = functools.partial(_toning_kernel, inv_hw=1.0 / HW)
    act_spec = pl.BlockSpec((1, C, HW), lambda b: (b, 0, 0))

    out = pl.pallas_call(
        kern,
        out_shape=jax.ShapeDtypeStruct((B, C, HW), x_nchw.dtype),
        grid=(B,),
        in_specs=[act_spec,
                  act_spec,
                  pl.BlockSpec((C, C), lambda b: (0, 0))],
        out_specs=act_spec,
        compiler_params=pltpu.CompilerParams(
            dimension_semantics=("parallel",)),            # v7x: shard over 2 TCs
    )(x_flat, x1_flat, wband)

    return out.reshape(B, C, H, W)


# ----------------------------------------------------------------------------
# Pure-JAX reference mirroring the PyTorch semantics (for verification)
# ----------------------------------------------------------------------------

def ref_forward(x, conv_w):
    B, C, H, W = x.shape
    k = conv_w.shape[0]
    pad = (k - 1) // 2

    x1 = inv_mag(x)
    y = jnp.mean(x1, axis=(2, 3))                          # (B, C) spatial mean
    yp = jnp.pad(y, ((0, 0), (pad, pad)))
    conv = sum(conv_w[t] * yp[:, t:t + C] for t in range(k))   # cross-correlation
    gate = jax.nn.sigmoid(conv)                            # (B, C)
    return x * gate[:, :, None, None]


# ----------------------------------------------------------------------------

if __name__ == "__main__":
    B, C, H, W = 2, 16, 16, 16                             # small, HW = 256 (lane-dense)

    key = jax.random.PRNGKey(0)
    kx, kw = jax.random.split(key)
    x = jax.random.normal(kx, (B, C, H, W), jnp.float32)   # NCHW, like PyTorch

    k = toning_kernel_size(C, b=1, gamma=2)                # C=16 -> k=3, pad=1
    conv_w = jax.random.normal(kw, (k,), jnp.float32) * 0.5

    fwd = jax.jit(toning_forward)
    out = jax.block_until_ready(fwd(x, conv_w))

    ref = ref_forward(x, conv_w)
    assert out.shape == x.shape
    err = float(jnp.max(jnp.abs(out - ref)))
    if err > 1e-3:
        raise AssertionError(f"Pallas output mismatch vs reference, max abs err = {err}")
    print("KERNEL_OK")
</pallas_src>

<mosaic_0001>
module attributes {stable_mosaic.version = 11 : i64} {
  func.func @_toning_kernel(%arg0: i32, %arg1: memref<1x16x256xf32, #tpu.memory_space<vmem>>, %arg2: memref<1x16x256xf32, #tpu.memory_space<vmem>>, %arg3: memref<16x16xf32, #tpu.memory_space<vmem>>, %arg4: memref<1x16x256xf32, #tpu.memory_space<vmem>>) attributes {dimension_semantics = [#tpu.dimension_semantics<parallel>], iteration_bounds = array<i64: 2>, scalar_prefetch = 0 : i64, scratch_operands = 0 : i64, tpu.core_type = #tpu.core_type<tc>, window_params = [{transform_indices = @transform_0, window_bounds = array<i64: 1, 16, 256>}, {transform_indices = @transform_1, window_bounds = array<i64: 1, 16, 256>}, {pipeline_mode = #tpu.pipeline_mode<synchronous>, transform_indices = @transform_2, window_bounds = array<i64: 16, 16>}, {transform_indices = @transform_3, window_bounds = array<i64: 1, 16, 256>}]} {
    %c0 = arith.constant 0 : index
    %c0_0 = arith.constant 0 : index
    %c0_1 = arith.constant 0 : index
    %0 = vector.load %arg2[%c0, %c0_0, %c0_1] : memref<1x16x256xf32, #tpu.memory_space<vmem>>, vector<1x16x256xf32>
    %1 = vector.shape_cast %0 : vector<1x16x256xf32> to vector<16x256xf32>
    %c0_2 = arith.constant 0 : index
    %c0_3 = arith.constant 0 : index
    %2 = vector.load %arg3[%c0_2, %c0_3] : memref<16x16xf32, #tpu.memory_space<vmem>>, vector<16x16xf32>
    %cst = arith.constant dense<0.000000e+00> : vector<16x256xf32>
    %3 = tpu.matmul %2, %1, %cst {dimension_numbers = #tpu.dot_dimension_numbers<[1], [0], [0], [1], [0, 0, 1, 1], [], []>} : vector<16x16xf32>, vector<16x256xf32>, vector<16x256xf32> -> vector<16x256xf32>
    %cst_4 = arith.constant dense<0.000000e+00> : vector<16xf32>
    %4 = vector.multi_reduction <add>, %3, %cst_4 [1] : vector<16x256xf32> to vector<16xf32>
    %5 = vector.shape_cast %4 : vector<16xf32> to vector<16x1xf32>
    %cst_5 = arith.constant 3.906250e-03 : f32
    %6 = vector.broadcast %cst_5 : f32 to vector<16x1xf32>
    %7 = arith.mulf %5, %6 : vector<16x1xf32>
    %cst_6 = arith.constant 0.000000e+00 : f32
    %8 = vector.broadcast %cst_6 : f32 to vector<16x1xf32>
    %9 = arith.subf %8, %7 : vector<16x1xf32>
    %10 = math.exp %9 : vector<16x1xf32>
    %cst_7 = arith.constant 1.000000e+00 : f32
    %11 = vector.broadcast %cst_7 : f32 to vector<16x1xf32>
    %12 = arith.addf %11, %10 : vector<16x1xf32>
    %cst_8 = arith.constant 1.000000e+00 : f32
    %13 = vector.broadcast %cst_8 : f32 to vector<16x1xf32>
    %14 = arith.divf %13, %12 : vector<16x1xf32>
    %c0_9 = arith.constant 0 : index
    %c0_10 = arith.constant 0 : index
    %c0_11 = arith.constant 0 : index
    %15 = vector.load %arg1[%c0_9, %c0_10, %c0_11] : memref<1x16x256xf32, #tpu.memory_space<vmem>>, vector<1x16x256xf32>
    %16 = vector.shape_cast %15 : vector<1x16x256xf32> to vector<16x256xf32>
    %17 = vector.broadcast %14 : vector<16x1xf32> to vector<16x256xf32>
    %18 = arith.mulf %16, %17 : vector<16x256xf32>
    %c0_12 = arith.constant 0 : index
    %c0_13 = arith.constant 0 : index
    %c0_14 = arith.constant 0 : index
    %19 = vector.load %arg4[%c0_12, %c0_13, %c0_14] : memref<1x16x256xf32, #tpu.memory_space<vmem>>, vector<1x16x256xf32>
    %20 = vector.shape_cast %19 : vector<1x16x256xf32> to vector<16x256xf32>
    %21 = vector.shape_cast %18 : vector<16x256xf32> to vector<1x16x256xf32>
    tpu.vector_store %arg4[%c0_12, %c0_13, %c0_14], %21 {strides = array<i32>} : memref<1x16x256xf32, #tpu.memory_space<vmem>>, vector<1x16x256xf32>,
    return
  }
  func.func @transform_0(%arg0: i32) -> (i32, i32, i32) {
    %c0_i32 = arith.constant 0 : i32
    %c0_i32_0 = arith.constant 0 : i32
    %c0_i32_1 = arith.constant 0 : i32
    return %arg0, %c0_i32, %c0_i32_0 : i32, i32, i32
  }
  func.func @transform_1(%arg0: i32) -> (i32, i32, i32) {
    %c0_i32 = arith.constant 0 : i32
    %c0_i32_0 = arith.constant 0 : i32
    %c0_i32_1 = arith.constant 0 : i32
    return %arg0, %c0_i32, %c0_i32_0 : i32, i32, i32
  }
  func.func @transform_2(%arg0: i32) -> (i32, i32) {
    %c0_i32 = arith.constant 0 : i32
    %c0_i32_0 = arith.constant 0 : i32
    %c0_i32_1 = arith.constant 0 : i32
    return %c0_i32, %c0_i32_0 : i32, i32
  }
  func.func @transform_3(%arg0: i32) -> (i32, i32, i32) {
    %c0_i32 = arith.constant 0 : i32
    %c0_i32_0 = arith.constant 0 : i32
    %c0_i32_1 = arith.constant 0 : i32
    return %arg0, %c0_i32, %c0_i32_0 : i32, i32, i32
  }
}

</mosaic_0001>

<llo_original>
// kernel: toning_forward.1
$region0: #{toning_forward.1}
  #allocation0 [shape = 'u32[]', space=smem, size = 0x4, offset = 0x4, fixed_abs, tag = 'smem constant byte address 0x4 - core index']
  #allocation1 [shape = 'u32[72,128]{1,0:T(1,128)}', space=vmem, size = 0x9000, scoped, tag = 'internal scratch']
  %s0 = inlined_call_operand.vmem [shape: f32[2,16,256], index: 0, kind: input, shape index: {}]
  %s1 = inlined_call_operand.vmem [shape: f32[2,16,256], index: 1, kind: input, shape index: {}]
  %s2 = inlined_call_operand.vmem [shape: f32[16,16], index: 2, kind: input, shape index: {}]
  %s3 = inlined_call_operand.vmem [shape: f32[2,16,256], index: 3, kind: output, shape index: {}]
  %s4 = sld [smem:[#allocation0]]
  $region45: #{toning_forward.1} parent=0
    _
  %s6 = ssub.s32 1, %s4
  %s7 = scalar_select 0, %s6, %s4
  loop: start=0, step=1, limit=4
  $region2: #{toning_forward.1} parent=0 // loop_pre_header
    _
  $region3: #{toning_forward.1} parent=0 // loop_header
    %s9 = sphi 0, %s13
    %p10 = scmp.ge.s32.totalorder %s9, 4
    %s19 = sphi 0, %s21
    %s22 = sphi 0, %s19
    %s23 = sphi 0, %s22
    %s39 = sphi 0, %s23
    %s45 = sphi 0, %s47
    %s48 = sphi 0, %s45
    %s49 = sphi 0, %s48
    %s65 = sphi 0, %s49
    %s69 = sphi 0, %s69
    %s71 = sphi 0, %s69
    %s72 = sphi 0, %s71
    %s86 = sphi 0, %s72
    %s92 = sphi 0, %s94
    %s95 = sphi 0, %s92
    %s96 = sphi 0, %s95
    %s112 = sphi 0, %s96
  $region4: #{toning_forward.1} parent=0 // loop_header_branch
    %12 = sbr.rel (%p10) target = $region8
  $region5: #{toning_forward.1} parent=0 // loop_body
    %s14 = ssub.s32 %s9, 1
    %s15 = ssub.s32 %s9, 2
    %s16 = sadd.s32 %s9, 1
    %s17 = ssub.s32 %s9, %s16
    %p18 = scmp.eq.s32.totalorder %s17, 0
    %s20 = sadd.s32 %s19, 1
    %s21 = scalar_select %p18, %s19, %s20
    %p24 = pneg %p18
    %p25 = scmp.eq.s32.totalorder %s9, 1
    %p26 = por %p24, %p25
    %p27 = scmp.ne.s32.totalorder %s19, %s22
    %p28 = scmp.eq.s32.totalorder %s9, 0
    %p29 = por %p27, %p28
    %p30 = scmp.ne.s32.totalorder %s19, %s22
    %p31 = scmp.eq.s32.totalorder %s14, 1
    %p32 = por %p30, %p31
    %p33 = scmp.ne.s32.totalorder %s22, %s23
    %p34 = scmp.eq.s32.totalorder %s14, 0
    %p35 = por %p33, %p34
    %p36 = scmp.ne.s32.totalorder %s22, %s23
    %p37 = scmp.eq.s32.totalorder %s15, 1
    %p38 = por %p36, %p37
    %p40 = scmp.ne.s32.totalorder %s23, %s39
    %p41 = scmp.eq.s32.totalorder %s15, 0
    %p42 = por %p40, %p41
    %s43 = ssub.s32 %s9, %s16
    %p44 = scmp.eq.s32.totalorder %s43, 0
    %s46 = sadd.s32 %s45, 1
    %s47 = scalar_select %p44, %s45, %s46
    %p50 = pneg %p44
    %p51 = scmp.eq.s32.totalorder %s9, 1
    %p52 = por %p50, %p51
    %p53 = scmp.ne.s32.totalorder %s45, %s48
    %p54 = scmp.eq.s32.totalorder %s9, 0
    %p55 = por %p53, %p54
    %p56 = scmp.ne.s32.totalorder %s45, %s48
    %p57 = scmp.eq.s32.totalorder %s14, 1
    %p58 = por %p56, %p57
    %p59 = scmp.ne.s32.totalorder %s48, %s49
    %p60 = scmp.eq.s32.totalorder %s14, 0
    %p61 = por %p59, %p60
    %p62 = scmp.ne.s32.totalorder %s48, %s49
    %p63 = scmp.eq.s32.totalorder %s15, 1
    %p64 = por %p62, %p63
    %p66 = scmp.ne.s32.totalorder %s49, %s65
    %p67 = scmp.eq.s32.totalorder %s15, 0
    %p68 = por %p66, %p67
    %s70 = sadd.s32 %s69, 1
    %p73 = scmp.eq.s32.totalorder %s9, 1
    %p74 = scmp.ne.s32.totalorder %s69, %s71
    %p75 = scmp.eq.s32.totalorder %s9, 0
    %p76 = por %p74, %p75
    %p77 = scmp.ne.s32.totalorder %s69, %s71
    %p78 = scmp.eq.s32.totalorder %s14, 1
    %p79 = por %p77, %p78
    %p80 = scmp.ne.s32.totalorder %s71, %s72
    %p81 = scmp.eq.s32.totalorder %s14, 0
    %p82 = por %p80, %p81
    %p83 = scmp.ne.s32.totalorder %s71, %s72
    %p84 = scmp.eq.s32.totalorder %s15, 1
    %p85 = por %p83, %p84
    %p87 = scmp.ne.s32.totalorder %s72, %s86
    %p88 = scmp.eq.s32.totalorder %s15, 0
    %p89 = por %p87, %p88
    %s90 = ssub.s32 %s9, %s16
    %p91 = scmp.eq.s32.totalorder %s90, 0
    %s93 = sadd.s32 %s92, 1
    %s94 = scalar_select %p91, %s92, %s93
    %p97 = pneg %p91
    %p98 = scmp.eq.s32.totalorder %s9, 1
    %p99 = por %p97, %p98
    %p100 = scmp.ne.s32.totalorder %s92, %s95
    %p101 = scmp.eq.s32.totalorder %s9, 0
    %p102 = por %p100, %p101
    %p103 = scmp.ne.s32.totalorder %s92, %s95
    %p104 = scmp.eq.s32.totalorder %s14, 1
    %p105 = por %p103, %p104
    %p106 = scmp.ne.s32.totalorder %s95, %s96
    %p107 = scmp.eq.s32.totalorder %s14, 0
    %p108 = por %p106, %p107
    %p109 = scmp.ne.s32.totalorder %s95, %s96
    %p110 = scmp.eq.s32.totalorder %s15, 1
    %p111 = por %p109, %p110
    %p113 = scmp.ne.s32.totalorder %s96, %s112
    %p114 = scmp.eq.s32.totalorder %s15, 0
    %p115 = por %p113, %p114
    %p116 = scmp.le.s32.totalorder 1, %s9
    %p117 = scmp.lt.s32.totalorder %s9, 3
    %p118 = pnand %p116, %p117
    %p119 = pneg %p118
    // Predicated region
    $region9: #{toning_forward.1} parent=5 // pred_check
      _
    $region10: #{toning_forward.1} parent=5 // pred_check_branch
      %121 = sbr.rel (%p118) target = $region12
    $region11: #{toning_forward.1} parent=5 // pred_region
      %s122 = ssub.s32 %s9, 1
      // Predicated region
      $region13: #{toning_forward.1} parent=11 // pred_check
        %p123 = pneg %p82
      $region14: #{toning_forward.1} parent=11 // pred_check_branch
        %125 = sbr.rel (%p123) target = $region16
      $region15: #{toning_forward.1} parent=11 // pred_region
        _
      $region16: #{toning_forward.1} parent=11 // pred_fallthru
        _
    $region12: #{toning_forward.1} parent=5 // pred_fallthru
      _
    %p126 = scmp.lt.s32.totalorder %s9, 2
    // Predicated region
    $region17: #{toning_forward.1} parent=5 // pred_check
      %p127 = pneg %p126
    $region18: #{toning_forward.1} parent=5 // pred_check_branch
      %129 = sbr.rel (%p127) target = $region20
    $region19: #{toning_forward.1} parent=5 // pred_region
      // Predicated region
      $region21: #{toning_forward.1} parent=19 // pred_check
        %p130 = pneg %p29
      $region22: #{toning_forward.1} parent=19 // pred_check_branch
        %132 = sbr.rel (%p130) target = $region24
      $region23: #{toning_forward.1} parent=19 // pred_region
        %p133 = scmp.lt.s32.totalorder %s9, 1
        %s134 = scalar_select %p133, %s9, 1
        %s135 = smul.addr %s134, 4
        %s136 = smul.addr %s135, 8
        %s137 = scalar_lea.vmem %s0, %s136
      $region24: #{toning_forward.1} parent=19 // pred_fallthru
        _
      // Predicated region
      $region25: #{toning_forward.1} parent=19 // pred_check
        %p138 = pneg %p55
      $region26: #{toning_forward.1} parent=19 // pred_check_branch
        %140 = sbr.rel (%p138) target = $region28
      $region27: #{toning_forward.1} parent=19 // pred_region
        %p141 = scmp.lt.s32.totalorder %s9, 1
        %s142 = scalar_select %p141, %s9, 1
        %s143 = smul.addr %s142, 4
        %s144 = smul.addr %s143, 8
        %s145 = scalar_lea.vmem %s1, %s144
      $region28: #{toning_forward.1} parent=19 // pred_fallthru
        _
    $region20: #{toning_forward.1} parent=5 // pred_fallthru
      _
    %p146 = scmp.le.s32.totalorder 1, %s9
    %p147 = scmp.lt.s32.totalorder %s9, 3
    %p148 = pnand %p146, %p147
    %p149 = pneg %p148
    // Predicated region
    $region29: #{toning_forward.1} parent=5 // pred_check
      _
    $region30: #{toning_forward.1} parent=5 // pred_check_branch
      %151 = sbr.rel (%p148) target = $region32
    $region31: #{toning_forward.1} parent=5 // pred_region
      %s152 = ssub.s32 %s9, 1
      %p153 = scmp.lt.s32.totalorder %s14, 1
      %s154 = scalar_select %p153, %s14, 1
      %s155 = smul.addr %s154, 4
      %s156 = smul.addr %s155, 8
      %s157 = scalar_lea.vmem %s0, %s156
      %p158 = pneg %p35
      %p159 = pneg %p32
      %p160 = scmp.lt.s32.totalorder %s14, 1
      %s161 = scalar_select %p160, %s14, 1
      %s162 = smul.addr %s161, 4
      %s163 = smul.addr %s162, 8
      %s164 = scalar_lea.vmem %s1, %s163
      %p165 = pneg %p61
      %p166 = pneg %p58
      %p167 = pneg %p82
      %p168 = pneg %p79
      %p169 = pneg %p108
      %p170 = pneg %p105
      %p171 = scmp.lt.s32.totalorder %s14, 1
      %s172 = scalar_select %p171, %s14, 1
      %s173 = smul.addr %s172, 4
      %s174 = smul.addr %s173, 8
      %s175 = scalar_lea.vmem %s3, %s174
      %p176 = scmp.lt.s32.totalorder %s14, 1
      %s177 = scalar_select %p176, %s14, 1
      %s178 = smul.addr %s177, 4
      %s179 = smul.addr %s178, 8
      %s180 = scalar_lea.vmem %s0, %s179
      %p181 = scmp.lt.s32.totalorder %s14, 1
      %s182 = scalar_select %p181, %s14, 1
      %s183 = smul.addr %s182, 4
      %s184 = smul.addr %s183, 8
      %s185 = scalar_lea.vmem %s1, %s184
      %p186 = scmp.lt.s32.totalorder %s14, 1
      %s187 = scalar_select %p186, %s14, 1
      %s188 = smul.addr %s187, 4
      %s189 = smul.addr %s188, 8
      %s190 = scalar_lea.vmem %s3, %s189
      %v191 = vld [vmem:[%s185] sm:$0xff]
      %v192 = vld [vmem:[%s185 + $0x8] sm:$0xff]
      %v193 = vld [vmem:[%s185 + $0x10] sm:$0xff]
      %v194 = vld [vmem:[%s185 + $0x18] sm:$0xff]
      %v195 = vld [vmem:[%s2] sm:$0xff]
      %v196 = vld [vmem:[%s2 + $0x8] sm:$0xff]
      %vm197 = vcmask 130048
      %v199 = vsel %vm197, %v195, 0
      %v202 = vsel %vm197, %v196, 0
      %204 = vmatpush.msra.mxu0 0.0
      %205 = vmatpush.msra.mxu0 0.0
      %206 = vmatpush.msra.mxu0 0.0
      %207 = vmatpush.msra.mxu0 0.0
      %208 = vmatpush.msra.mxu0 0.0
      %209 = vmatpush.msra.mxu0 0.0
      %210 = vmatpush.msra.mxu0 0.0
      %211 = vmatpush.msra.mxu0 0.0
      %212 = vmatpush.msra.mxu0 0.0
      %213 = vmatpush.msra.mxu0 0.0
      %214 = vmatpush.msra.mxu0 0.0
      %215 = vmatpush.msra.mxu0 0.0
      %216 = vmatpush.msra.mxu0 0.0
      %217 = vmatpush.msra.mxu0 0.0
      %218 = vmatpush.msra.mxu0 %v193
      %219 = vmatpush.msra.mxu0 %v191
      %220 = vmatmul.f32.gmra.mxu0 %v199
      %v221 = vpop.f32.mrf.mxu0
      %v222 = vadd.f32 0.0, %v221
      %223 = vmatmul.f32.gmra.mxu0 %v202
      %v224 = vpop.f32.mrf.mxu0
      %v225 = vadd.f32 0.0, %v224
      %226 = vdwg.mxu0
      %227 = vmatpush.msra.mxu0 0.0
      %228 = vmatpush.msra.mxu0 0.0
      %229 = vmatpush.msra.mxu0 0.0
      %230 = vmatpush.msra.mxu0 0.0
      %231 = vmatpush.msra.mxu0 0.0
      %232 = vmatpush.msra.mxu0 0.0
      %233 = vmatpush.msra.mxu0 0.0
      %234 = vmatpush.msra.mxu0 0.0
      %235 = vmatpush.msra.mxu0 0.0
      %236 = vmatpush.msra.mxu0 0.0
      %237 = vmatpush.msra.mxu0 0.0
      %238 = vmatpush.msra.mxu0 0.0
      %239 = vmatpush.msra.mxu0 0.0
      %240 = vmatpush.msra.mxu0 0.0
      %241 = vmatpush.msra.mxu0 %v194
      %242 = vmatpush.msra.mxu0 %v192
      %243 = vmatmul.f32.gmra.mxu0 %v199
      %v244 = vpop.f32.mrf.mxu0
      %v245 = vadd.f32 0.0, %v244
      %246 = vmatmul.f32.gmra.mxu0 %v202
      %v247 = vpop.f32.mrf.mxu0
      %v248 = vadd.f32 0.0, %v247
      %249 = vdwg.mxu0
      %v250 = vadd.f32 %v222, %v245
      %251 = vadd.xlane.f32.xlu0 %v250
      %v252 = vpop.xlane.xlu0 %251
      %v253 = vadd.f32 %v225, %v248
      %254 = vadd.xlane.f32.xlu0 %v253
      %v255 = vpop.xlane.xlu0 %254
      %v256 = vmul.f32 %v252, 0.00390625
      %v257 = vmul.f32 %v255, 0.00390625
      %v258 = vsub.f32 0.0, %v256
      %v259 = vsub.f32 0.0, %v257
      %v260 = vmul.f32 %v258, 1.442695
      %v261 = vpow.pop %v260
      %v262 = vmul.f32 %v259, 1.442695
      %v263 = vpow.pop %v262
      %v264 = vadd.f32 %v261, 1.0
      %v265 = vadd.f32 %v263, 1.0
      %v266 = vrcp.pop %v264
      %v267 = vmul.f32 %v264, %v266
      %v268 = vsub.f32 1.0, %v267
      %v269 = vmul.f32 %v266, %v268
      %v270 = vadd.f32 %v266, %v269
      %vm271 = vweird.f32 %v264
      %vm272 = vweird.f32 %v266
      %vm273 = vmor %vm271, %vm272
      %v274 = vsel %vm273, %v266, %v270
      %v275 = vand.u32 2147483647, %v264
      %vm276 = vcmp.eq.f32.partialorder %v275, 8.507059e+37
      %v277 = vand.u32 %v264, 2147483648
      %v278 = vor.u32 1.1754944e-38, %v277
      %v279 = vsel %vm276, %v278, %v274
      %v280 = vmul.f32 1.0, %v279
      %v281 = vrcp.pop %v265
      %v282 = vmul.f32 %v265, %v281
      %v283 = vsub.f32 1.0, %v282
      %v284 = vmul.f32 %v281, %v283
      %v285 = vadd.f32 %v281, %v284
      %vm286 = vweird.f32 %v265
      %vm287 = vweird.f32 %v281
      %vm288 = vmor %vm286, %vm287
      %v289 = vsel %vm288, %v281, %v285
      %v290 = vand.u32 2147483647, %v265
      %vm291 = vcmp.eq.f32.partialorder %v290, 8.507059e+37
      %v292 = vand.u32 %v265, 2147483648
      %v293 = vor.u32 1.1754944e-38, %v292
      %v294 = vsel %vm291, %v293, %v289
      %v295 = vmul.f32 1.0, %v294
      %v296 = vld [vmem:[%s180] sm:$0xff]
      %v297 = vld [vmem:[%s180 + $0x8] sm:$0xff]
      %v298 = vld [vmem:[%s180 + $0x10] sm:$0xff]
      %v299 = vld [vmem:[%s180 + $0x18] sm:$0xff]
      %v300 = vmul.f32 %v296, %v280
      %v301 = vmul.f32 %v297, %v280
      %v302 = vmul.f32 %v298, %v295
      %v303 = vmul.f32 %v299, %v295
      %304 = vst [vmem:[%s190] sm:$0xff] %v300
      %305 = vst [vmem:[%s190 + $0x8] sm:$0xff] %v301
      %306 = vst [vmem:[%s190 + $0x10] sm:$0xff] %v302
      %307 = vst [vmem:[%s190 + $0x18] sm:$0xff] %v303
      %p308 = scmp.lt.s32.totalorder %s14, 1
      %s309 = scalar_select %p308, %s14, 1
      %s310 = smul.addr %s309, 4
      %s311 = smul.addr %s310, 8
      %s312 = scalar_lea.vmem %s3, %s311
      // Predicated region
      $region33: #{toning_forward.1} parent=31 // pred_check
        %p313 = pneg %p105
      $region34: #{toning_forward.1} parent=31 // pred_check_branch
        %315 = sbr.rel (%p313) target = $region36
      $region35: #{toning_forward.1} parent=31 // pred_region
        _
      $region36: #{toning_forward.1} parent=31 // pred_fallthru
        _
    $region32: #{toning_forward.1} parent=5 // pred_fallthru
      _
    %p316 = scmp.le.s32.totalorder 2, %s9
    // Predicated region
    $region37: #{toning_forward.1} parent=5 // pred_check
      %p317 = pneg %p316
    $region38: #{toning_forward.1} parent=5 // pred_check_branch
      %319 = sbr.rel (%p317) target = $region40
    $region39: #{toning_forward.1} parent=5 // pred_region
      %s320 = ssub.s32 %s9, 2
      // Predicated region
      $region41: #{toning_forward.1} parent=39 // pred_check
        %p321 = pneg %p111
      $region42: #{toning_forward.1} parent=39 // pred_check_branch
        %323 = sbr.rel (%p321) target = $region44
      $region43: #{toning_forward.1} parent=39 // pred_region
        %p324 = scmp.lt.s32.totalorder %s15, 1
        %s325 = scalar_select %p324, %s15, 1
        %s326 = smul.addr %s325, 4
        %s327 = smul.addr %s326, 8
        %s328 = scalar_lea.vmem %s3, %s327
      $region44: #{toning_forward.1} parent=39 // pred_fallthru
        _
    $region40: #{toning_forward.1} parent=5 // pred_fallthru
      _
  $region6: #{toning_forward.1} parent=0 // loop_footer
    %s13 = sadd.s32 1, %s9
  $region7: #{toning_forward.1} parent=0 // loop_footer_branch
    %8 = sbr.rel target = $region3
  $region8: #{toning_forward.1} parent=0 // loop_exit
    _

</llo_original>
